<compile_context>
chip_gen: v5e
topology: v5e:2x2
jax: 0.10.0
libtpu: 0.0.40
codegen_flags: <defaults>
</compile_context>

<pallas_src>
import jax
import jax.numpy as jnp
from jax import lax
from jax.experimental import pallas as pl
from jax.experimental.pallas import tpu as pltpu


def _round_up(x, m):
    return ((x + m - 1) // m) * m


# ---------------------------------------------------------------------------
# Kernel 0:  XW = X @ W   (computed once; bf16 output)
# ---------------------------------------------------------------------------
def xw_kernel(x_ref, w_ref, xw_ref):
    xw = jnp.dot(x_ref[...].astype(jnp.bfloat16),
                 w_ref[...].astype(jnp.bfloat16),
                 preferred_element_type=jnp.float32)
    xw_ref[...] = xw.astype(jnp.bfloat16)


# ---------------------------------------------------------------------------
# Kernel 1:  node_emb = dropout(relu(A_norm @ XW + b))
# grid = (row tiles [parallel], K tiles [arbitrary, last]); output block is the
# f32 accumulator (revisited across K), finalized with bias/ReLU/dropout-scale.
# ---------------------------------------------------------------------------
def gcn_agg_kernel(a_ref, xw_ref, b_ref, mask_ref, out_ref):
    k = pl.program_id(1)

    @pl.when(k == 0)
    def _():
        out_ref[...] = jnp.zeros_like(out_ref)

    out_ref[...] += jnp.dot(a_ref[...], xw_ref[...],
                            preferred_element_type=jnp.float32)

    @pl.when(k == pl.num_programs(1) - 1)
    def _():
        h = jnp.maximum(out_ref[...] + b_ref[...], 0.0)      # bias + ReLU (f32)
        out_ref[...] = h * mask_ref[...]                      # inverted dropout (0 or 1/(1-p))


def gcn_forward(a_norm, x, w, bias, dropout_key, *, p_drop=0.5, training=True):
    n, f = x.shape
    e = w.shape[1]
    e_pad = _round_up(e, 128)                    # lane-dense embedding dim
    tm = _round_up(n, 8) if n <= 256 else 256    # row tile
    n_pad = _round_up(n, tm)
    tk = tm                                      # K tile (n_pad % tk == 0 by construction)

    x_pad = jnp.pad(x, ((0, n_pad - n), (0, 0)))
    w_pad = jnp.pad(w, ((0, 0), (0, e_pad - e)))
    b_pad = jnp.pad(bias.reshape(1, -1), ((0, 0), (0, e_pad - e)))
    # adjacency is the dominant HBM operand -> stream it in bf16, accumulate in f32
    a_pad = jnp.pad(a_norm, ((0, n_pad - n), (0, n_pad - n))).astype(jnp.bfloat16)

    # F.dropout defaults: p=0.5, training=True -> inverted dropout, scale 1/(1-p).
    # TODO(synk): mask drawn from JAX PRNG, not torch's RNG stream (same Bernoulli law).
    if training:
        keep = jax.random.bernoulli(dropout_key, 1.0 - p_drop, (n_pad, e_pad))
        drop_scale = keep.astype(jnp.float32) / (1.0 - p_drop)
    else:
        drop_scale = jnp.ones((n_pad, e_pad), jnp.float32)

    # kernel 0: XW (hoisted out of the per-row-tile loop)
    xw = pl.pallas_call(
        xw_kernel,
        out_shape=jax.ShapeDtypeStruct((n_pad, e_pad), jnp.bfloat16),
        grid=(n_pad // tm,),
        in_specs=[pl.BlockSpec((tm, f), lambda i: (i, 0)),
                  pl.BlockSpec((f, e_pad), lambda i: (0, 0))],
        out_specs=pl.BlockSpec((tm, e_pad), lambda i: (i, 0)),
        compiler_params=pltpu.CompilerParams(dimension_semantics=("parallel",)),
    )(x_pad, w_pad)

    # kernel 1: tiled A @ XW with bias/ReLU/dropout epilogue
    node_emb = pl.pallas_call(
        gcn_agg_kernel,
        out_shape=jax.ShapeDtypeStruct((n_pad, e_pad), jnp.float32),
        grid=(n_pad // tm, n_pad // tk),
        in_specs=[
            pl.BlockSpec((tm, tk), lambda i, k: (i, k)),       # A tile (bf16)
            pl.BlockSpec((tk, e_pad), lambda i, k: (k, 0)),    # XW K-slab (bf16)
            pl.BlockSpec((1, e_pad), lambda i, k: (0, 0)),     # bias
            pl.BlockSpec((tm, e_pad), lambda i, k: (i, 0)),    # dropout scale
        ],
        out_specs=pl.BlockSpec((tm, e_pad), lambda i, k: (i, 0)),
        compiler_params=pltpu.CompilerParams(
            dimension_semantics=("parallel", "arbitrary"),
            # tile budget: (tm*tk bf16 + tk*e_pad bf16 + 2*tm*e_pad f32) * 2 buffers
            # stays well under v7x's 64 MiB physical VMEM at tm=tk=256, e_pad<=512
            vmem_limit_bytes=48 * 1024 * 1024),
    )(a_pad, xw, b_pad, drop_scale)
    return node_emb  # (n_pad, e_pad), padded rows/cols sliced off by the caller


# ---------------------------------------------------------------------------
# Kernel 2: batched per-trajectory gather with length masking.
# A group of trajectories is gathered with one masked one-hot (N, T) matmul onto
# the MXU, producing a lane-dense (T, E_pad) tile.
# TODO(synk): for node counts in the thousands, replace the one-hot matmul with a
# scalar-prefetch pl.Element row gather (O(L*E) DMA instead of O(N*L*E) FLOPs).
# ---------------------------------------------------------------------------
def gather_kernel(seq_ref, valid_ref, emb_ref, out_ref):
    n_pad = emb_ref.shape[0]
    t = seq_ref.shape[-1]
    seq = seq_ref[0]                                          # (1, T) int32
    valid = valid_ref[0]                                      # (1, T) f32
    n_idx = lax.broadcasted_iota(jnp.int32, (n_pad, t), 0)
    onehot = jnp.where(n_idx == seq, 1.0, 0.0) * valid        # (N_pad, T), masked
    # exact index_select semantics -> keep the gather matmul in f32
    out_ref[0] = lax.dot_general(
        onehot, emb_ref[...],
        dimension_numbers=(((0,), (0,)), ((), ())),
        preferred_element_type=jnp.float32)                   # (T, E_pad)


def traj_gather(node_emb_pad, traj_seqs, seq_lengths):
    b, l = traj_seqs.shape
    n_pad, e_pad = node_emb_pad.shape
    # trajectories per grid step: aim for >= 128 output rows per matmul
    gb = max(1, min(b, pl.cdiv(128, l)))
    b_pad = _round_up(b, gb)
    t = gb * l
    num_g = b_pad // gb

    seq = jnp.zeros((b_pad, l), jnp.int32).at[:b].set(traj_seqs.astype(jnp.int32))
    valid = (jnp.arange(l)[None, :] < seq_lengths[:, None]).astype(jnp.float32)
    valid = jnp.zeros((b_pad, l), jnp.float32).at[:b].set(valid)

    seq_g = seq.reshape(num_g, 1, t)
    valid_g = valid.reshape(num_g, 1, t)

    out = pl.pallas_call(
        gather_kernel,
        out_shape=jax.ShapeDtypeStruct((num_g, t, e_pad), jnp.float32),
        grid=(num_g,),
        in_specs=[
            pl.BlockSpec((1, 1, t), lambda g: (g, 0, 0)),     # node ids for this group
            pl.BlockSpec((1, 1, t), lambda g: (g, 0, 0)),     # validity mask
            pl.BlockSpec((n_pad, e_pad), lambda g: (0, 0)),   # full node embeddings
        ],
        out_specs=pl.BlockSpec((1, t, e_pad), lambda g: (g, 0, 0)),
        compiler_params=pltpu.CompilerParams(dimension_semantics=("parallel",)),
    )(seq_g, valid_g, node_emb_pad)
    return out.reshape(b_pad, l, e_pad)[:b]                   # (B, L, E_pad)


# ---------------------------------------------------------------------------
# GCNConv normalization (self-loops + symmetric deg^-1/2), dense setup in plain JAX.
# ---------------------------------------------------------------------------
def build_gcn_norm_adj(edge_index, edge_weight, num_nodes):
    src, dst = edge_index[0], edge_index[1]
    a = jnp.zeros((num_nodes, num_nodes), jnp.float32)
    a = a.at[dst, src].add(edge_weight)                       # message src -> dst
    a = a + jnp.eye(num_nodes, dtype=jnp.float32)             # self loops, fill_value=1.0
    deg = a.sum(axis=1)
    dinv = jnp.where(deg > 0, lax.rsqrt(deg), 0.0)
    return dinv[:, None] * a * dinv[None, :]


def traj_embedding_forward(params, network, traj_seqs, seq_lengths, dropout_key):
    """Mirrors TrajEmbedding.forward: returns (embedded_seq_tensor [B,L,E], seq_lengths)."""
    e = params["w"].shape[1]
    a_norm = build_gcn_norm_adj(network["edge_index"], network["edge_weight"],
                                network["x"].shape[0])
    node_emb = gcn_forward(a_norm, network["x"], params["w"], params["b"], dropout_key)
    embedded = traj_gather(node_emb, traj_seqs, seq_lengths)  # (B, L, E_pad)
    # TODO(synk): fuse the gather as an epilogue of the GCN call to skip the node_emb
    # HBM round trip; kept as a separate lane-dense kernel here for clarity.
    return embedded[:, :, :e], seq_lengths


if __name__ == "__main__":
    key = jax.random.PRNGKey(0)
    N, F, E = 32, 16, 32        # num_nodes, feature_size, embedding_size
    B, L = 2, 8                 # batch, max trajectory length
    k1, k2, k3, k4, k5 = jax.random.split(key, 5)

    # node features
    x = jax.random.normal(k1, (N, F), jnp.float32)

    # simple bidirectional ring graph with random positive edge weights
    src = jnp.concatenate([jnp.arange(N), (jnp.arange(N) + 1) % N])
    dst = jnp.concatenate([(jnp.arange(N) + 1) % N, jnp.arange(N)])
    edge_index = jnp.stack([src, dst]).astype(jnp.int32)
    edge_weight = jax.random.uniform(k2, (edge_index.shape[1],), jnp.float32, 0.1, 1.0)

    # deterministic GCNConv parameters (glorot-ish scale, zero bias)
    w = jax.random.normal(k3, (F, E), jnp.float32) * (1.0 / jnp.sqrt(F))
    b = jnp.zeros((E,), jnp.float32)

    # trajectories: ragged [8, 5], 0-padded to max length (matches the torch padding loop)
    seq_lengths = jnp.array([8, 5], jnp.int32)
    traj = jax.random.randint(k4, (B, L), 0, N, jnp.int32)
    pad_mask = jnp.arange(L)[None, :] < seq_lengths[:, None]
    traj = jnp.where(pad_mask, traj, 0)

    network = dict(x=x, edge_index=edge_index, edge_weight=edge_weight)
    params = dict(w=w, b=b)

    embedded, lens = traj_embedding_forward(params, network, traj, seq_lengths, k5)
    embedded = jax.block_until_ready(embedded)

    assert embedded.shape == (B, L, E)
    assert bool(jnp.all(jnp.isfinite(embedded)))
    # positions beyond seq_length must remain exactly zero (as in the torch loop)
    assert bool(jnp.all(embedded[1, 5:] == 0.0))
    print("KERNEL_OK")
</pallas_src>

<mosaic_0001>
module attributes {stable_mosaic.version = 11 : i64} {
  func.func @xw_kernel(%arg0: i32, %arg1: memref<32x16xf32, #tpu.memory_space<vmem>>, %arg2: memref<16x128xf32, #tpu.memory_space<vmem>>, %arg3: memref<32x128xbf16, #tpu.memory_space<vmem>>) attributes {dimension_semantics = [#tpu.dimension_semantics<parallel>], iteration_bounds = array<i64: 1>, scalar_prefetch = 0 : i64, scratch_operands = 0 : i64, tpu.core_type = #tpu.core_type<tc>, window_params = [{transform_indices = @transform_0, window_bounds = array<i64: 32, 16>}, {pipeline_mode = #tpu.pipeline_mode<synchronous>, transform_indices = @transform_1, window_bounds = array<i64: 16, 128>}, {transform_indices = @transform_2, window_bounds = array<i64: 32, 128>}]} {
    %c0 = arith.constant 0 : index
    %c0_0 = arith.constant 0 : index
    %0 = vector.load %arg1[%c0, %c0_0] : memref<32x16xf32, #tpu.memory_space<vmem>>, vector<32x16xf32>
    %1 = arith.truncf %0 : vector<32x16xf32> to vector<32x16xbf16>
    %c0_1 = arith.constant 0 : index
    %c0_2 = arith.constant 0 : index
    %2 = vector.load %arg2[%c0_1, %c0_2] : memref<16x128xf32, #tpu.memory_space<vmem>>, vector<16x128xf32>
    %3 = arith.truncf %2 : vector<16x128xf32> to vector<16x128xbf16>
    %cst = arith.constant dense<0.000000e+00> : vector<32x128xf32>
    %4 = tpu.matmul %1, %3, %cst {dimension_numbers = #tpu.dot_dimension_numbers<[1], [0], [0], [1], [0, 0, 1, 1], [], []>} : vector<32x16xbf16>, vector<16x128xbf16>, vector<32x128xf32> -> vector<32x128xf32>
    %5 = arith.truncf %4 : vector<32x128xf32> to vector<32x128xbf16>
    %c0_3 = arith.constant 0 : index
    %c0_4 = arith.constant 0 : index
    %6 = vector.load %arg3[%c0_3, %c0_4] : memref<32x128xbf16, #tpu.memory_space<vmem>>, vector<32x128xbf16>
    tpu.vector_store %arg3[%c0_3, %c0_4], %5 {strides = array<i32>} : memref<32x128xbf16, #tpu.memory_space<vmem>>, vector<32x128xbf16>,
    return
  }
  func.func @transform_0(%arg0: i32) -> (i32, i32) {
    %c0_i32 = arith.constant 0 : i32
    %c0_i32_0 = arith.constant 0 : i32
    return %arg0, %c0_i32 : i32, i32
  }
  func.func @transform_1(%arg0: i32) -> (i32, i32) {
    %c0_i32 = arith.constant 0 : i32
    %c0_i32_0 = arith.constant 0 : i32
    %c0_i32_1 = arith.constant 0 : i32
    return %c0_i32, %c0_i32_0 : i32, i32
  }
  func.func @transform_2(%arg0: i32) -> (i32, i32) {
    %c0_i32 = arith.constant 0 : i32
    %c0_i32_0 = arith.constant 0 : i32
    return %arg0, %c0_i32 : i32, i32
  }
}

</mosaic_0001>

<llo_original>
// kernel: tpu_custom_call.1
$region0: #{tpu_custom_call.1}
  #allocation0 [shape = 'u32[]', space=smem, size = 0x4, offset = 0x4, fixed_abs, tag = 'smem constant byte address 0x4 - core index']
  #allocation1 [shape = 'u32[72,128]{1,0:T(1,128)}', space=vmem, size = 0x9000, scoped, tag = 'internal scratch']
  %s0 = inlined_call_operand.vmem [shape: f32[32,16], index: 0, kind: input, shape index: {}]
  %s1 = inlined_call_operand.vmem [shape: f32[16,128], index: 1, kind: input, shape index: {}]
  %s2 = inlined_call_operand.hbm [shape: bf16[32,128], index: 2, kind: output, shape index: {}]
  %s3 = sld [smem:[#allocation0]]
  $region18: #{tpu_custom_call.1} parent=0
    _
  %s5 = ssub.s32 1, %s3
  %s6 = scalar_select 0, %s5, %s3
  $region1: #{tpu_custom_call.1} parent=0
    #allocation2 [shape = 'u8[8192]{0}', space=vmem, size = 0x2000, scoped, tag = 'output window, operand 0, single buffered']
    #allocation3 [shape = 's32[1]{0}', space=sflag, size = 0x4, scoped, tag = 'scoped memory for tpu_custom_call.1']
    %7 = vsyncpa [#allocation3], 0
    // Predicated region
    $region2: #{tpu_custom_call.1} parent=1 // pred_check
      _
    $region3: #{tpu_custom_call.1} parent=1 // pred_check_branch
      %9 = sbr.rel (0) target = $region5
    $region4: #{tpu_custom_call.1} parent=1 // pred_region
      _
    $region5: #{tpu_custom_call.1} parent=1 // pred_fallthru
      _
    // Predicated region
    $region6: #{tpu_custom_call.1} parent=1 // pred_check
      _
    $region7: #{tpu_custom_call.1} parent=1 // pred_check_branch
      %11 = sbr.rel (0) target = $region9
    $region8: #{tpu_custom_call.1} parent=1 // pred_region
      _
    $region9: #{tpu_custom_call.1} parent=1 // pred_fallthru
      _
    %v13 = vld [vmem:[%s0] sm:$0xff]
    %v14 = vld [vmem:[%s0 + $0x8] sm:$0xff]
    %v15 = vld [vmem:[%s0 + $0x10] sm:$0xff]
    %v16 = vld [vmem:[%s0 + $0x18] sm:$0xff]
    %v17 = vpack.c.bf16 %v14, %v13
    %v18 = vpack.c.bf16 %v16, %v15
    %v19 = vld [vmem:[%s1] sm:$0xff]
    %v20 = vld [vmem:[%s1 + $0x8] sm:$0xff]
    %v21 = vpack.c.bf16 %v20, %v19
    %vm22 = vcmask 130048
    %v24 = vsel %vm22, %v17, 0
    %v27 = vsel %vm22, %v18, 0
    %29 = vmatpush.bf16.msra.mxu0 0
    %30 = vmatpush.bf16.msra.mxu0 0
    %31 = vmatpush.bf16.msra.mxu0 0
    %32 = vmatpush.bf16.msra.mxu0 0
    %33 = vmatpush.bf16.msra.mxu0 0
    %34 = vmatpush.bf16.msra.mxu0 0
    %35 = vmatpush.bf16.msra.mxu0 0
    %36 = vmatpush.bf16.msra.mxu0 %v21
    %37 = vmatmul.bf16.gmra.mxu0 %v24
    %v38 = vpop.f32.mrf.mxu0
    %v39 = vadd.f32 0.0, %v38
    %v40 = vpop.f32.mrf.mxu0
    %v41 = vadd.f32 0.0, %v40
    %42 = vmatmul.bf16.gmra.mxu0 %v27
    %v43 = vpop.f32.mrf.mxu0
    %v44 = vadd.f32 0.0, %v43
    %v45 = vpop.f32.mrf.mxu0
    %v46 = vadd.f32 0.0, %v45
    %47 = vdwg.mxu0
    %v48 = vpack.c.bf16 %v39, %v39
    %v49 = vpack.c.bf16 %v41, %v41
    %v50 = vpack.c.bf16 %v44, %v44
    %v51 = vpack.c.bf16 %v46, %v46
    %52 = vst [vmem:[#allocation2] sm:$0xf] %v48
    %53 = vst [vmem:[#allocation2 + $0x4] sm:$0xf] %v49
    %54 = vst [vmem:[#allocation2 + $0x8] sm:$0xf] %v50
    %55 = vst [vmem:[#allocation2 + $0xc] sm:$0xf] %v51
    // Predicated region
    $region10: #{tpu_custom_call.1} parent=1 // pred_check
      _
    $region11: #{tpu_custom_call.1} parent=1 // pred_check_branch
      %57 = sbr.rel (0) target = $region13
    $region12: #{tpu_custom_call.1} parent=1 // pred_region
      %59 = vsyncadd [#allocation3], 0
      %s60 = sshll.u32 [#allocation2], 4
      %s61 = int_to_ptr.vmem [resolvable:$true] %s60
      %s62 = sshll.u32 %s2, 4
      %s63 = int_to_ptr.hbm [resolvable:$true] %s62
      %68 = dma.vmem_to_hbm [thread:$0]  %s61, 256, %s63, [#allocation3], 64, 64, 4
    $region13: #{tpu_custom_call.1} parent=1 // pred_fallthru
      _
    // Predicated region
    $region14: #{tpu_custom_call.1} parent=1 // pred_check
      _
    $region15: #{tpu_custom_call.1} parent=1 // pred_check_branch
      %70 = sbr.rel (0) target = $region17
    $region16: #{tpu_custom_call.1} parent=1 // pred_region
      %72 = dma.done [#allocation3], 256
    $region17: #{tpu_custom_call.1} parent=1 // pred_fallthru
      _
    %73 = vsyncpa [#allocation3], 1

</llo_original>
